<compile_context>
chip_gen: v6e
topology: v6e:2x2x1
jax: 0.10.0
libtpu: 0.0.40
codegen_flags: <defaults>
</compile_context>

<pallas_src>
import jax
import jax.numpy as jnp
import numpy as np
from jax.experimental import pallas as pl
from jax.experimental.pallas import tpu as pltpu

# small config consistent with the module's __init__
CONFIG = dict(enc_hid_dim=16, dec_hid_dim=32)
SRC_LEN = 8
BATCH = 2


def attention_kernel(hid_ref, enc_ref, w_ref, vblk_ref, out_ref):
    """Single invocation; the whole (tiny) problem lives in VMEM.

    hid_ref:  (1, B*Hdec)              hidden rows packed along lanes
    enc_ref:  (S, B*E)                 encoder outputs, batch packed along lanes
    w_ref:    (B*Hdec + B*E + 1, B*H)  stacked [Whblk ; Weblk ; bias_row]
    vblk_ref: (B*H, B)                 block-diagonal v columns
    out_ref:  (S, B)                   softmax over S for every batch column (torch layout)
    """
    BHdec = hid_ref.shape[1]
    BE = enc_ref.shape[1]

    # Static slices into the stacked weight slab.
    w_hid = w_ref[0:BHdec, :]                       # (B*Hdec, B*H)
    w_enc = w_ref[BHdec:BHdec + BE, :]              # (B*E,   B*H)
    bias = w_ref[BHdec + BE:BHdec + BE + 1, :]      # (1,     B*H)

    # One MXU pass each, covering every batch element at once; bias folded into the
    # broadcast hidden term so there's a single add chain before the tanh.
    hb = jnp.dot(hid_ref[...], w_hid, preferred_element_type=jnp.float32) + bias   # (1, B*H)
    e_part = jnp.dot(enc_ref[...], w_enc, preferred_element_type=jnp.float32)      # (S, B*H)
    energy = jnp.tanh(e_part + hb)                                                  # (S, B*H)

    # scores[s, b] = sum_h energy[s, b*H + h] * v[h]  -- one MXU matmul against the
    # block-diagonal v, result lands directly in (S, B) layout.
    scores = jnp.dot(energy, vblk_ref[...], preferred_element_type=jnp.float32)     # (S, B)

    # Numerically stable softmax over src_len (axis 0), all batch columns at once.
    m = jnp.max(scores, axis=0, keepdims=True)                   # (1, B)
    e = jnp.exp(scores - m)                                      # (S, B)
    denom = jnp.sum(e, axis=0, keepdims=True)                    # (1, B)
    out_ref[...] = (e * pl.reciprocal(denom, approx=False)).astype(out_ref.dtype)


def prepare_attention_params(W_attn, b_attn, W_v, dec_hid, batch):
    """One-time weight preparation (hoisted out of the per-call hot path).

    W_attn: (H, Hdec + E)  attn.weight  (cat order in forward is [hidden, encoder])
    b_attn: (H,)           attn.bias
    W_v:    (1, H)         v.weight (no bias)
    Returns:
      W_slab: (B*Hdec + B*E + 1, B*H)  stacked [block-diag Wh ; block-diag We ; tiled bias]
      Vblk:   (B*H, B)                 block-diagonal v columns
    """
    H = W_attn.shape[0]
    Hdec = dec_hid
    Wh = W_attn[:, :Hdec].T                          # (Hdec, H)  hidden part of the cat
    We = W_attn[:, Hdec:].T                          # (E, H)     encoder part of the cat
    eyeB = jnp.eye(batch, dtype=W_attn.dtype)
    Whblk = jnp.kron(eyeB, Wh)                       # (B*Hdec, B*H) block-diagonal
    Weblk = jnp.kron(eyeB, We)                       # (B*E,   B*H) block-diagonal
    bias_row = jnp.tile(b_attn, batch).reshape(1, batch * H)        # (1, B*H)
    W_slab = jnp.concatenate([Whblk, Weblk, bias_row], axis=0)      # (B*(Hdec+E)+1, B*H)
    Vblk = jnp.kron(eyeB, W_v.reshape(H, 1))                        # (B*H, B)
    return W_slab, Vblk


@jax.jit
def attention_pallas(hidden, encoder_outputs, W_slab, Vblk):
    """hidden: (B, Hdec); encoder_outputs: (S, B, E). Returns (S, B), softmax over S.

    Per-call path = two free row-major reshapes + one pallas_call, all in one jit dispatch.
    """
    S, B, E = encoder_outputs.shape
    enc2 = encoder_outputs.reshape(S, B * E)          # free row-major reshape, no transpose
    hid2 = hidden.reshape(1, -1)                      # (1, B*Hdec), free

    vmem = pl.BlockSpec(memory_space=pltpu.MemorySpace.VMEM)
    out = pl.pallas_call(
        attention_kernel,
        out_shape=jax.ShapeDtypeStruct((S, B), jnp.float32),
        in_specs=[vmem, vmem, vmem, vmem],
        out_specs=vmem,
    )(hid2, enc2, W_slab, Vblk)
    return out                                        # (S, B): already torch layout


def attention_reference(hidden, encoder_outputs, W_attn, b_attn, W_v):
    """Pure-JAX reference mirroring the PyTorch forward."""
    S = encoder_outputs.shape[0]
    hid_rep = jnp.broadcast_to(hidden[None], (S,) + hidden.shape)       # repeat(S,1,1)
    cat = jnp.concatenate([hid_rep, encoder_outputs], axis=2)
    energy = jnp.tanh(cat @ W_attn.T + b_attn)
    attention = (energy @ W_v.T)[..., 0]                                # squeeze(2)
    return jax.nn.softmax(attention, axis=0)


if __name__ == "__main__":
    enc_hid = CONFIG["enc_hid_dim"]
    dec_hid = CONFIG["dec_hid_dim"]
    E = enc_hid * 2
    in_dim = E + dec_hid

    key = jax.random.PRNGKey(0)
    k1, k2, k3, k4, k5 = jax.random.split(key, 5)

    hidden = jax.random.normal(k1, (BATCH, dec_hid), dtype=jnp.float32)
    encoder_outputs = jax.random.normal(k2, (SRC_LEN, BATCH, E), dtype=jnp.float32)

    # deterministic synthetic parameters (shapes from the nn.Linear definitions)
    W_attn = 0.1 * jax.random.normal(k3, (dec_hid, in_dim), dtype=jnp.float32)  # attn.weight
    b_attn = 0.1 * jax.random.normal(k4, (dec_hid,), dtype=jnp.float32)         # attn.bias
    W_v = 0.1 * jax.random.normal(k5, (1, dec_hid), dtype=jnp.float32)          # v.weight (no bias)

    # One-time parameter prep (NOT in the hot path).
    W_slab, Vblk = prepare_attention_params(W_attn, b_attn, W_v, dec_hid, BATCH)
    W_slab, Vblk = jax.block_until_ready((W_slab, Vblk))

    out = attention_pallas(hidden, encoder_outputs, W_slab, Vblk)
    out = jax.block_until_ready(out)

    ref = attention_reference(hidden, encoder_outputs, W_attn, b_attn, W_v)
    np.testing.assert_allclose(np.asarray(out), np.asarray(ref), rtol=1e-5, atol=1e-5)
    # softmax over dim=0 must sum to 1 per batch column
    np.testing.assert_allclose(np.asarray(out).sum(axis=0), np.ones(BATCH), rtol=1e-5, atol=1e-5)

    print("KERNEL_OK")
</pallas_src>

<mosaic_0001>
module attributes {stable_mosaic.version = 11 : i64} {
  func.func @attention_kernel(%arg0: memref<1x64xf32, #tpu.memory_space<vmem>>, %arg1: memref<8x64xf32, #tpu.memory_space<vmem>>, %arg2: memref<129x64xf32, #tpu.memory_space<vmem>>, %arg3: memref<64x2xf32, #tpu.memory_space<vmem>>, %arg4: memref<8x2xf32, #tpu.memory_space<vmem>>) attributes {dimension_semantics = [], scalar_prefetch = 0 : i64, scratch_operands = 0 : i64, tpu.core_type = #tpu.core_type<tc>} {
    %c0 = arith.constant 0 : index
    %c0_0 = arith.constant 0 : index
    %0 = vector.load %arg2[%c0, %c0_0] : memref<129x64xf32, #tpu.memory_space<vmem>>, vector<64x64xf32>
    %c64 = arith.constant 64 : index
    %c0_1 = arith.constant 0 : index
    %1 = vector.load %arg2[%c64, %c0_1] : memref<129x64xf32, #tpu.memory_space<vmem>>, vector<64x64xf32>
    %c128 = arith.constant 128 : index
    %c0_2 = arith.constant 0 : index
    %2 = vector.load %arg2[%c128, %c0_2] : memref<129x64xf32, #tpu.memory_space<vmem>>, vector<1x64xf32>
    %c0_3 = arith.constant 0 : index
    %c0_4 = arith.constant 0 : index
    %3 = vector.load %arg0[%c0_3, %c0_4] : memref<1x64xf32, #tpu.memory_space<vmem>>, vector<1x64xf32>
    %cst = arith.constant dense<0.000000e+00> : vector<1x64xf32>
    %4 = tpu.matmul %3, %0, %cst {dimension_numbers = #tpu.dot_dimension_numbers<[1], [0], [0], [1], [0, 0, 1, 1], [], []>} : vector<1x64xf32>, vector<64x64xf32>, vector<1x64xf32> -> vector<1x64xf32>
    %5 = arith.addf %4, %2 : vector<1x64xf32>
    %c0_5 = arith.constant 0 : index
    %c0_6 = arith.constant 0 : index
    %6 = vector.load %arg1[%c0_5, %c0_6] : memref<8x64xf32, #tpu.memory_space<vmem>>, vector<8x64xf32>
    %cst_7 = arith.constant dense<0.000000e+00> : vector<8x64xf32>
    %7 = tpu.matmul %6, %1, %cst_7 {dimension_numbers = #tpu.dot_dimension_numbers<[1], [0], [0], [1], [0, 0, 1, 1], [], []>} : vector<8x64xf32>, vector<64x64xf32>, vector<8x64xf32> -> vector<8x64xf32>
    %8 = vector.broadcast %5 : vector<1x64xf32> to vector<8x64xf32>
    %9 = arith.addf %7, %8 : vector<8x64xf32>
    %10 = math.tanh %9 : vector<8x64xf32>
    %c0_8 = arith.constant 0 : index
    %c0_9 = arith.constant 0 : index
    %11 = vector.load %arg3[%c0_8, %c0_9] : memref<64x2xf32, #tpu.memory_space<vmem>>, vector<64x2xf32>
    %cst_10 = arith.constant dense<0.000000e+00> : vector<8x2xf32>
    %12 = tpu.matmul %10, %11, %cst_10 {dimension_numbers = #tpu.dot_dimension_numbers<[1], [0], [0], [1], [0, 0, 1, 1], [], []>} : vector<8x64xf32>, vector<64x2xf32>, vector<8x2xf32> -> vector<8x2xf32>
    %cst_11 = arith.constant dense<0xFF800000> : vector<2xf32>
    %13 = vector.multi_reduction <maximumf>, %12, %cst_11 [0] : vector<8x2xf32> to vector<2xf32>
    %14 = vector.shape_cast %13 : vector<2xf32> to vector<1x2xf32>
    %15 = vector.broadcast %14 : vector<1x2xf32> to vector<8x2xf32>
    %16 = arith.subf %12, %15 : vector<8x2xf32>
    %17 = math.exp %16 : vector<8x2xf32>
    %cst_12 = arith.constant dense<0.000000e+00> : vector<2xf32>
    %18 = vector.multi_reduction <add>, %17, %cst_12 [0] : vector<8x2xf32> to vector<2xf32>
    %19 = vector.shape_cast %18 : vector<2xf32> to vector<1x2xf32>
    %20 = tpu.reciprocal %19 : vector<1x2xf32> -> vector<1x2xf32>
    %21 = vector.broadcast %20 : vector<1x2xf32> to vector<8x2xf32>
    %22 = arith.mulf %17, %21 : vector<8x2xf32>
    %c0_13 = arith.constant 0 : index
    %c0_14 = arith.constant 0 : index
    %23 = vector.load %arg4[%c0_13, %c0_14] : memref<8x2xf32, #tpu.memory_space<vmem>>, vector<8x2xf32>
    tpu.vector_store %arg4[%c0_13, %c0_14], %22 {strides = array<i32>} : memref<8x2xf32, #tpu.memory_space<vmem>>, vector<8x2xf32>,
    return
  }
}

</mosaic_0001>

<llo_original>
// kernel: attention_pallas.1
$region0: #{attention_pallas.1}
  #allocation0 [shape = 'u32[]', space=smem, size = 0x4, offset = 0x4, fixed_abs, tag = 'smem constant byte address 0x4 - core index']
  #allocation1 [shape = 'u32[144,128]{1,0:T(1,128)}', space=vmem, size = 0x12000, scoped, tag = 'internal scratch']
  %s0 = inlined_call_operand.vmem [shape: f32[1,64], index: 0, kind: input, shape index: {}]
  %s1 = inlined_call_operand.vmem [shape: f32[8,64], index: 1, kind: input, shape index: {}]
  %s2 = inlined_call_operand.vmem [shape: f32[129,64], index: 2, kind: input, shape index: {}]
  %s3 = inlined_call_operand.vmem [shape: f32[64,2], index: 3, kind: input, shape index: {}]
  %s4 = inlined_call_operand.vmem [shape: f32[8,2], index: 4, kind: output, shape index: {}]
  %s5 = sld [smem:[#allocation0]]
  $region26: #{attention_pallas.1} parent=0
    _
  %s7 = ssub.s32 1, %s5
  %s8 = scalar_select 0, %s7, %s5
  // Predicated region
  $region2: #{attention_pallas.1} parent=0 // pred_check
    _
  $region3: #{attention_pallas.1} parent=0 // pred_check_branch
    %10 = sbr.rel (0) target = $region5
  $region4: #{attention_pallas.1} parent=0 // pred_region
    _
  $region5: #{attention_pallas.1} parent=0 // pred_fallthru
    _
  // Predicated region
  $region6: #{attention_pallas.1} parent=0 // pred_check
    _
  $region7: #{attention_pallas.1} parent=0 // pred_check_branch
    %12 = sbr.rel (0) target = $region9
  $region8: #{attention_pallas.1} parent=0 // pred_region
    _
  $region9: #{attention_pallas.1} parent=0 // pred_fallthru
    _
  // Predicated region
  $region10: #{attention_pallas.1} parent=0 // pred_check
    _
  $region11: #{attention_pallas.1} parent=0 // pred_check_branch
    %14 = sbr.rel (0) target = $region13
  $region12: #{attention_pallas.1} parent=0 // pred_region
    _
  $region13: #{attention_pallas.1} parent=0 // pred_fallthru
    _
  // Predicated region
  $region14: #{attention_pallas.1} parent=0 // pred_check
    _
  $region15: #{attention_pallas.1} parent=0 // pred_check_branch
    %16 = sbr.rel (0) target = $region17
  $region16: #{attention_pallas.1} parent=0 // pred_region
    _
  $region17: #{attention_pallas.1} parent=0 // pred_fallthru
    _
  %v17 = vld [vmem:[%s2] sm:$0xff]
  %v18 = vld [vmem:[%s2 + $0x8] sm:$0xff]
  %v19 = vld [vmem:[%s2 + $0x10] sm:$0xff]
  %v20 = vld [vmem:[%s2 + $0x18] sm:$0xff]
  %v21 = vld [vmem:[%s2 + $0x20] sm:$0xff]
  %v22 = vld [vmem:[%s2 + $0x28] sm:$0xff]
  %v23 = vld [vmem:[%s2 + $0x30] sm:$0xff]
  %v24 = vld [vmem:[%s2 + $0x38] sm:$0xff]
  %v25 = vld [vmem:[%s2 + $0x40] sm:$0xff]
  %v26 = vld [vmem:[%s2 + $0x48] sm:$0xff]
  %v27 = vld [vmem:[%s2 + $0x50] sm:$0xff]
  %v28 = vld [vmem:[%s2 + $0x58] sm:$0xff]
  %v29 = vld [vmem:[%s2 + $0x60] sm:$0xff]
  %v30 = vld [vmem:[%s2 + $0x68] sm:$0xff]
  %v31 = vld [vmem:[%s2 + $0x70] sm:$0xff]
  %v32 = vld [vmem:[%s2 + $0x78] sm:$0xff]
  %v33 = vld [vmem:[%s2 + $0x80] sm:$0x1]
  %v34 = vld [vmem:[%s0] sm:$0x1]
  %vm35 = vcmask 523264
  %v37 = vsel %vm35, %v34, 0
  %39 = vmatprep.subr.mxu0 0.0
  %40 = vmatpush1.msra.mxu0 0.0
  %41 = vmatprep.subr.mxu0 0.0
  %42 = vmatpush1.msra.mxu0 0.0
  %43 = vmatprep.subr.mxu0 0.0
  %44 = vmatpush1.msra.mxu0 0.0
  %45 = vmatprep.subr.mxu0 0.0
  %46 = vmatpush1.msra.mxu0 0.0
  %47 = vmatprep.subr.mxu0 0.0
  %48 = vmatpush1.msra.mxu0 0.0
  %49 = vmatprep.subr.mxu0 0.0
  %50 = vmatpush1.msra.mxu0 0.0
  %51 = vmatprep.subr.mxu0 0.0
  %52 = vmatpush1.msra.mxu0 0.0
  %53 = vmatprep.subr.mxu0 0.0
  %54 = vmatpush1.msra.mxu0 0.0
  %55 = vmatprep.subr.mxu0 0.0
  %56 = vmatpush1.msra.mxu0 %v24
  %57 = vmatprep.subr.mxu0 0.0
  %58 = vmatpush1.msra.mxu0 %v23
  %59 = vmatprep.subr.mxu0 0.0
  %60 = vmatpush1.msra.mxu0 %v22
  %61 = vmatprep.subr.mxu0 0.0
  %62 = vmatpush1.msra.mxu0 %v21
  %63 = vmatprep.subr.mxu0 0.0
  %64 = vmatpush1.msra.mxu0 %v20
  %65 = vmatprep.subr.mxu0 0.0
  %66 = vmatpush1.msra.mxu0 %v19
  %67 = vmatprep.subr.mxu0 0.0
  %68 = vmatpush1.msra.mxu0 %v18
  %69 = vmatprep.subr.mxu0 0.0
  %70 = vmatpush1.msra.mxu0 %v17
  %71 = vmatprep.subr.mxu0 0.0
  %72 = vmatpush2.msra.mxu0 0.0
  %73 = vmatprep.subr.mxu0 0.0
  %74 = vmatpush2.msra.mxu0 0.0
  %75 = vmatprep.subr.mxu0 0.0
  %76 = vmatpush2.msra.mxu0 0.0
  %77 = vmatprep.subr.mxu0 0.0
  %78 = vmatpush2.msra.mxu0 0.0
  %79 = vmatprep.subr.mxu0 0.0
  %80 = vmatpush2.msra.mxu0 0.0
  %81 = vmatprep.subr.mxu0 0.0
  %82 = vmatpush2.msra.mxu0 0.0
  %83 = vmatprep.subr.mxu0 0.0
  %84 = vmatpush2.msra.mxu0 0.0
  %85 = vmatprep.subr.mxu0 0.0
  %86 = vmatpush2.msra.mxu0 0.0
  %87 = vmatprep.subr.mxu0 0.0
  %88 = vmatpush2.msra.mxu0 0.0
  %89 = vmatprep.subr.mxu0 0.0
  %90 = vmatpush2.msra.mxu0 0.0
  %91 = vmatprep.subr.mxu0 0.0
  %92 = vmatpush2.msra.mxu0 0.0
  %93 = vmatprep.subr.mxu0 0.0
  %94 = vmatpush2.msra.mxu0 0.0
  %95 = vmatprep.subr.mxu0 0.0
  %96 = vmatpush2.msra.mxu0 0.0
  %97 = vmatprep.subr.mxu0 0.0
  %98 = vmatpush2.msra.mxu0 0.0
  %99 = vmatprep.subr.mxu0 0.0
  %100 = vmatpush2.msra.mxu0 0.0
  %101 = vmatprep.subr.mxu0 0.0
  %102 = vmatpush2.msra.mxu0 0.0
  %103 = vmatprep.mubr.f32.mxu0 0.0
  %104 = vmatmul.mubr.f32.gmra.mxu0 %v37
  %v105 = vpop.f32.mrf.mxu0
  %v106 = vadd.f32 %v33, %v105
  %v107 = vpop.f32.mrf.mxu0
  %108 = vdwg.mxu0
  %v109 = vld [vmem:[%s1] sm:$0xff]
  %v110 = vlaneseq
  %v111 = vshrl.u32 %v110, 7
  %v112 = vsub.s32 0, %v111
  %v113 = vrot.slane %v106, %v112
  %v115 = vsel %vm35, %v109, 0
  %117 = vmatprep.subr.mxu0 0.0
  %118 = vmatpush1.msra.mxu0 0.0
  %119 = vmatprep.subr.mxu0 0.0
  %120 = vmatpush1.msra.mxu0 0.0
  %121 = vmatprep.subr.mxu0 0.0
  %122 = vmatpush1.msra.mxu0 0.0
  %123 = vmatprep.subr.mxu0 0.0
  %124 = vmatpush1.msra.mxu0 0.0
  %125 = vmatprep.subr.mxu0 0.0
  %126 = vmatpush1.msra.mxu0 0.0
  %127 = vmatprep.subr.mxu0 0.0
  %128 = vmatpush1.msra.mxu0 0.0
  %129 = vmatprep.subr.mxu0 0.0
  %130 = vmatpush1.msra.mxu0 0.0
  %131 = vmatprep.subr.mxu0 0.0
  %132 = vmatpush1.msra.mxu0 0.0
  %133 = vmatprep.subr.mxu0 0.0
  %134 = vmatpush1.msra.mxu0 %v32
  %135 = vmatprep.subr.mxu0 0.0
  %136 = vmatpush1.msra.mxu0 %v31
  %137 = vmatprep.subr.mxu0 0.0
  %138 = vmatpush1.msra.mxu0 %v30
  %139 = vmatprep.subr.mxu0 0.0
  %140 = vmatpush1.msra.mxu0 %v29
  %141 = vmatprep.subr.mxu0 0.0
  %142 = vmatpush1.msra.mxu0 %v28
  %143 = vmatprep.subr.mxu0 0.0
  %144 = vmatpush1.msra.mxu0 %v27
  %145 = vmatprep.subr.mxu0 0.0
  %146 = vmatpush1.msra.mxu0 %v26
  %147 = vmatprep.subr.mxu0 0.0
  %148 = vmatpush1.msra.mxu0 %v25
  %149 = vmatprep.subr.mxu0 0.0
  %150 = vmatpush2.msra.mxu0 0.0
  %151 = vmatprep.subr.mxu0 0.0
  %152 = vmatpush2.msra.mxu0 0.0
  %153 = vmatprep.subr.mxu0 0.0
  %154 = vmatpush2.msra.mxu0 0.0
  %155 = vmatprep.subr.mxu0 0.0
  %156 = vmatpush2.msra.mxu0 0.0
  %157 = vmatprep.subr.mxu0 0.0
  %158 = vmatpush2.msra.mxu0 0.0
  %159 = vmatprep.subr.mxu0 0.0
  %160 = vmatpush2.msra.mxu0 0.0
  %161 = vmatprep.subr.mxu0 0.0
  %162 = vmatpush2.msra.mxu0 0.0
  %163 = vmatprep.subr.mxu0 0.0
  %164 = vmatpush2.msra.mxu0 0.0
  %165 = vmatprep.subr.mxu0 0.0
  %166 = vmatpush2.msra.mxu0 0.0
  %167 = vmatprep.subr.mxu0 0.0
  %168 = vmatpush2.msra.mxu0 0.0
  %169 = vmatprep.subr.mxu0 0.0
  %170 = vmatpush2.msra.mxu0 0.0
  %171 = vmatprep.subr.mxu0 0.0
  %172 = vmatpush2.msra.mxu0 0.0
  %173 = vmatprep.subr.mxu0 0.0
  %174 = vmatpush2.msra.mxu0 0.0
  %175 = vmatprep.subr.mxu0 0.0
  %176 = vmatpush2.msra.mxu0 0.0
  %177 = vmatprep.subr.mxu0 0.0
  %178 = vmatpush2.msra.mxu0 0.0
  %179 = vmatprep.subr.mxu0 0.0
  %180 = vmatpush2.msra.mxu0 0.0
  %181 = vmatprep.mubr.f32.mxu0 0.0
  %182 = vmatmul.mubr.f32.gmra.mxu0 %v115
  %v183 = vpop.f32.mrf.mxu0
  %v184 = vadd.f32 %v113, %v183
  %v185 = vpop.f32.mrf.mxu0
  %186 = vdwg.mxu0
  %v187 = vtanh.pop %v184
  %v188 = vld [vmem:[%s3] sm:$0xff]
  %v189 = vld [vmem:[%s3 + $0x8] sm:$0xff]
  %v190 = vld [vmem:[%s3 + $0x10] sm:$0xff]
  %v191 = vld [vmem:[%s3 + $0x18] sm:$0xff]
  %v192 = vld [vmem:[%s3 + $0x20] sm:$0xff]
  %v193 = vld [vmem:[%s3 + $0x28] sm:$0xff]
  %v194 = vld [vmem:[%s3 + $0x30] sm:$0xff]
  %v195 = vld [vmem:[%s3 + $0x38] sm:$0xff]
  %v197 = vsel %vm35, %v187, 0
  %199 = vmatprep.subr.mxu0 0.0
  %200 = vmatpush1.msra.mxu0 0.0
  %201 = vmatprep.subr.mxu0 0.0
  %202 = vmatpush1.msra.mxu0 0.0
  %203 = vmatprep.subr.mxu0 0.0
  %204 = vmatpush1.msra.mxu0 0.0
  %205 = vmatprep.subr.mxu0 0.0
  %206 = vmatpush1.msra.mxu0 0.0
  %207 = vmatprep.subr.mxu0 0.0
  %208 = vmatpush1.msra.mxu0 0.0
  %209 = vmatprep.subr.mxu0 0.0
  %210 = vmatpush1.msra.mxu0 0.0
  %211 = vmatprep.subr.mxu0 0.0
  %212 = vmatpush1.msra.mxu0 0.0
  %213 = vmatprep.subr.mxu0 0.0
  %214 = vmatpush1.msra.mxu0 0.0
  %215 = vmatprep.subr.mxu0 0.0
  %216 = vmatpush1.msra.mxu0 %v195
  %217 = vmatprep.subr.mxu0 0.0
  %218 = vmatpush1.msra.mxu0 %v194
  %219 = vmatprep.subr.mxu0 0.0
  %220 = vmatpush1.msra.mxu0 %v193
  %221 = vmatprep.subr.mxu0 0.0
  %222 = vmatpush1.msra.mxu0 %v192
  %223 = vmatprep.subr.mxu0 0.0
  %224 = vmatpush1.msra.mxu0 %v191
  %225 = vmatprep.subr.mxu0 0.0
  %226 = vmatpush1.msra.mxu0 %v190
  %227 = vmatprep.subr.mxu0 0.0
  %228 = vmatpush1.msra.mxu0 %v189
  %229 = vmatprep.subr.mxu0 0.0
  %230 = vmatpush1.msra.mxu0 %v188
  %231 = vmatprep.subr.mxu0 0.0
  %232 = vmatpush2.msra.mxu0 0.0
  %233 = vmatprep.subr.mxu0 0.0
  %234 = vmatpush2.msra.mxu0 0.0
  %235 = vmatprep.subr.mxu0 0.0
  %236 = vmatpush2.msra.mxu0 0.0
  %237 = vmatprep.subr.mxu0 0.0
  %238 = vmatpush2.msra.mxu0 0.0
  %239 = vmatprep.subr.mxu0 0.0
  %240 = vmatpush2.msra.mxu0 0.0
  %241 = vmatprep.subr.mxu0 0.0
  %242 = vmatpush2.msra.mxu0 0.0
  %243 = vmatprep.subr.mxu0 0.0
  %244 = vmatpush2.msra.mxu0 0.0
  %245 = vmatprep.subr.mxu0 0.0
  %246 = vmatpush2.msra.mxu0 0.0
  %247 = vmatprep.subr.mxu0 0.0
  %248 = vmatpush2.msra.mxu0 0.0
  %249 = vmatprep.subr.mxu0 0.0
  %250 = vmatpush2.msra.mxu0 0.0
  %251 = vmatprep.subr.mxu0 0.0
  %252 = vmatpush2.msra.mxu0 0.0
  %253 = vmatprep.subr.mxu0 0.0
  %254 = vmatpush2.msra.mxu0 0.0
  %255 = vmatprep.subr.mxu0 0.0
  %256 = vmatpush2.msra.mxu0 0.0
  %257 = vmatprep.subr.mxu0 0.0
  %258 = vmatpush2.msra.mxu0 0.0
  %259 = vmatprep.subr.mxu0 0.0
  %260 = vmatpush2.msra.mxu0 0.0
  %261 = vmatprep.subr.mxu0 0.0
  %262 = vmatpush2.msra.mxu0 0.0
  %263 = vmatprep.mubr.f32.mxu0 0.0
  %264 = vmatmul.mubr.f32.gmra.mxu0 %v197
  %v265 = vpop.f32.mrf.mxu0
  %v266 = vadd.f32 0.0, %v265
  %v267 = vpop.f32.mrf.mxu0
  %268 = vdwg.mxu0
  %vm269 = vcmask 15360
  %v270 = vsel %vm269, %v266, -inf
  %v271 = vrot.slane %v270, 4
  %v272 = vmax.f32 %v270, %v271
  %v273 = vrot.slane %v272, 2
  %v274 = vmax.f32 %v272, %v273
  %v275 = vrot.slane %v274, 1
  %v276 = vmax.f32 %v274, %v275
  %v277 = vsub.f32 %v266, %v276
  %v278 = vmul.f32 %v277, 1.442695
  %v279 = vpow.pop %v278
  %v280 = vsel %vm269, %v279, 0.0
  %v281 = vrot.slane %v280, 4
  %v282 = vadd.f32 %v280, %v281
  %v283 = vrot.slane %v282, 2
  %v284 = vadd.f32 %v282, %v283
  %v285 = vrot.slane %v284, 1
  %v286 = vadd.f32 %v284, %v285
  %v287 = vrcp.pop %v286
  %v288 = vmul.f32 %v279, %v287
  %289 = vst.msk [vmem:[%s4] sm:$0xff] %vm269, %v288
  // Predicated region
  $region18: #{attention_pallas.1} parent=0 // pred_check
    _
  $region19: #{attention_pallas.1} parent=0 // pred_check_branch
    %291 = sbr.rel (0) target = $region21
  $region20: #{attention_pallas.1} parent=0 // pred_region
    _
  $region21: #{attention_pallas.1} parent=0 // pred_fallthru
    _
  // Predicated region
  $region22: #{attention_pallas.1} parent=0 // pred_check
    _
  $region23: #{attention_pallas.1} parent=0 // pred_check_branch
    %293 = sbr.rel (0) target = $region25
  $region24: #{attention_pallas.1} parent=0 // pred_region
    _
  $region25: #{attention_pallas.1} parent=0 // pred_fallthru
    _

</llo_original>
